<compile_context>
chip_gen: v7x
topology: tpu7x:2x2x1
jax: 0.10.0
libtpu: 0.0.40
codegen_flags: <defaults>
</compile_context>

<pallas_src>
import jax
import jax.numpy as jnp
from jax.experimental import pallas as pl
from jax.experimental.pallas import tpu as pltpu


def _rnn_recurrence_kernel(xproj_ref, whh_ref, h_ref, h_scratch):
    """One grid step == Tc RNN timesteps (grid axis is sequential/'arbitrary').

    xproj_ref : (Tc, B, H)  precomputed x_t @ Wih^T + b_ih + b_hh for this chunk
    whh_ref   : (H, H)      hidden->hidden weight, already transposed (Whh^T)
    h_ref     : (Tc, B, H)  output hidden states for this chunk
    h_scratch : VMEM (B, H) float32 hidden state carried across grid steps
    """
    @pl.when(pl.program_id(0) == 0)
    def _():
        h_scratch[...] = jnp.zeros_like(h_scratch)

    whh = whh_ref[...]                      # (H, H)
    tc = xproj_ref.shape[0]                 # static chunk length

    def step(i, h_prev):
        pre = xproj_ref[i] + jnp.dot(h_prev, whh,
                                     preferred_element_type=jnp.float32)
        h_new = jnp.tanh(pre)               # (B, H) f32
        h_ref[i] = h_new.astype(h_ref.dtype)
        return h_new

    # Unrolled so the scheduler can overlap tanh (EUP) with the next step's MXU push.
    h_last = jax.lax.fori_loop(0, tc, step, h_scratch[...], unroll=True)
    h_scratch[...] = h_last


def _pick_time_chunk(T, max_chunk=32):
    for tc in (32, 16, 8, 4, 2, 1):
        if tc <= max_chunk and T % tc == 0:
            return tc
    return 1


def vanilla_rnn_forward(x, params):
    """x: (B, T, I) float32 (batch_first, like the PyTorch module).

    Returns (out, hidden) with out: (B*T, O), hidden: (1, B, H).
    """
    w_ih, w_hh, b_ih, b_hh, w_fc, b_fc = params
    B, T, I = x.shape
    H = w_hh.shape[0]

    # Hoisted input projection as one big matmul, emitted directly time-major
    # (fuses the batch_first -> time-major transpose into the matmul output).
    x_proj = jnp.einsum("bti,hi->tbh", x, w_ih) + (b_ih + b_hh)   # (T, B, H) f32
    x_proj = x_proj.astype(jnp.float32)

    whh_t = jnp.transpose(w_hh)                                   # (H, H) == Whh^T

    tc = _pick_time_chunk(T)

    hs_tm = pl.pallas_call(
        _rnn_recurrence_kernel,
        out_shape=jax.ShapeDtypeStruct((T, B, H), jnp.float32),
        grid_spec=pltpu.PrefetchScalarGridSpec(
            num_scalar_prefetch=0,
            grid=(T // tc,),
            in_specs=[
                pl.BlockSpec((tc, B, H), lambda c: (c, 0, 0)),    # x_proj chunk
                pl.BlockSpec((H, H), lambda c: (0, 0)),           # Whh^T (constant)
            ],
            out_specs=pl.BlockSpec((tc, B, H), lambda c: (c, 0, 0)),
            scratch_shapes=[pltpu.VMEM((B, H), jnp.float32)],
        ),
        compiler_params=pltpu.CompilerParams(
            dimension_semantics=("arbitrary",),   # time recurrence is sequential
        ),
    )(x_proj, whh_t)                                              # (T, B, H)

    # Final hidden state = last timestep's hidden state, shaped (n_layers=1, B, H).
    hidden = hs_tm[-1][None].astype(x.dtype)

    # FC layer hoisted out of the loop: one (B*T, H) @ (H, O) matmul on the
    # lane-dense hidden-state tensor, matching out.contiguous().view(-1, H) ordering.
    out_flat = jnp.transpose(hs_tm, (1, 0, 2)).reshape(B * T, H)
    out = (out_flat @ jnp.transpose(w_fc) + b_fc).astype(x.dtype)
    return out, hidden


def _reference_forward(x, params):
    """Pure-JAX reference matching torch semantics."""
    w_ih, w_hh, b_ih, b_hh, w_fc, b_fc = params
    B, T, I = x.shape
    H = w_hh.shape[0]

    def step(h, x_t):
        h_new = jnp.tanh(x_t @ w_ih.T + b_ih + h @ w_hh.T + b_hh)
        return h_new, h_new

    h0 = jnp.zeros((B, H), jnp.float32)
    hN, hs = jax.lax.scan(step, h0, jnp.transpose(x, (1, 0, 2)))  # hs: (T, B, H)
    out_bth = jnp.transpose(hs, (1, 0, 2))                        # (B, T, H)
    out = out_bth.reshape(B * T, H) @ w_fc.T + b_fc
    return out, hN[None]


def init_params(key, input_size, hidden_dim, output_size):
    """Deterministic init mirroring PyTorch default uniform(-1/sqrt(H), 1/sqrt(H))."""
    ks = jax.random.split(key, 6)
    k_rnn = 1.0 / jnp.sqrt(hidden_dim)
    k_fc = 1.0 / jnp.sqrt(hidden_dim)
    w_ih = jax.random.uniform(ks[0], (hidden_dim, input_size), jnp.float32, -k_rnn, k_rnn)
    w_hh = jax.random.uniform(ks[1], (hidden_dim, hidden_dim), jnp.float32, -k_rnn, k_rnn)
    b_ih = jax.random.uniform(ks[2], (hidden_dim,), jnp.float32, -k_rnn, k_rnn)
    b_hh = jax.random.uniform(ks[3], (hidden_dim,), jnp.float32, -k_rnn, k_rnn)
    w_fc = jax.random.uniform(ks[4], (output_size, hidden_dim), jnp.float32, -k_fc, k_fc)
    b_fc = jax.random.uniform(ks[5], (output_size,), jnp.float32, -k_fc, k_fc)
    return (w_ih, w_hh, b_ih, b_hh, w_fc, b_fc)


if __name__ == "__main__":
    # small shapes consistent with the module's forward: x is (batch, seq, input_size)
    B, T, I, H, O = 2, 8, 32, 32, 16

    key = jax.random.PRNGKey(0)
    k_x, k_p = jax.random.split(key)
    x = jax.random.normal(k_x, (B, T, I), jnp.float32)
    params = init_params(k_p, I, H, O)

    out, hidden = jax.block_until_ready(vanilla_rnn_forward(x, params))

    ref_out, ref_hidden = _reference_forward(x, params)
    assert out.shape == (B * T, O), out.shape
    assert hidden.shape == (1, B, H), hidden.shape
    assert jnp.allclose(out, ref_out, atol=1e-5, rtol=1e-5)
    assert jnp.allclose(hidden, ref_hidden, atol=1e-5, rtol=1e-5)

    print("KERNEL_OK")
</pallas_src>

<mosaic_0001>
module attributes {stable_mosaic.version = 11 : i64} {
  func.func @_rnn_recurrence_kernel(%arg0: i32, %arg1: memref<8x2x32xf32, #tpu.memory_space<vmem>>, %arg2: memref<32x32xf32, #tpu.memory_space<vmem>>, %arg3: memref<8x2x32xf32, #tpu.memory_space<vmem>>, %arg4: memref<2x32xf32, #tpu.memory_space<vmem>>) attributes {dimension_semantics = [#tpu.dimension_semantics<arbitrary>], iteration_bounds = array<i64: 1>, scalar_prefetch = 0 : i64, scratch_operands = 1 : i64, tpu.core_type = #tpu.core_type<tc>, window_params = [{transform_indices = @transform_0, window_bounds = array<i64: 8, 2, 32>}, {pipeline_mode = #tpu.pipeline_mode<synchronous>, transform_indices = @transform_1, window_bounds = array<i64: 32, 32>}, {transform_indices = @transform_2, window_bounds = array<i64: 8, 2, 32>}]} {
    %c0_i32 = arith.constant 0 : i32
    %0 = arith.cmpi eq, %arg0, %c0_i32 : i32
    %1 = arith.extui %0 : i1 to i32
    %c0_i32_0 = arith.constant 0 : i32
    %2 = arith.cmpi ne, %1, %c0_i32_0 : i32
    scf.if %2 {
      %cst_46 = arith.constant 0.000000e+00 : f32
      %86 = vector.broadcast %cst_46 : f32 to vector<2x32xf32>
      %c0_47 = arith.constant 0 : index
      %c0_48 = arith.constant 0 : index
      %87 = vector.load %arg4[%c0_47, %c0_48] : memref<2x32xf32, #tpu.memory_space<vmem>>, vector<2x32xf32>
      tpu.vector_store %arg4[%c0_47, %c0_48], %86 {strides = array<i32>} : memref<2x32xf32, #tpu.memory_space<vmem>>, vector<2x32xf32>,
    } else {
    }
    %c0 = arith.constant 0 : index
    %c0_1 = arith.constant 0 : index
    %3 = vector.load %arg2[%c0, %c0_1] : memref<32x32xf32, #tpu.memory_space<vmem>>, vector<32x32xf32>
    %c0_2 = arith.constant 0 : index
    %c0_3 = arith.constant 0 : index
    %4 = vector.load %arg4[%c0_2, %c0_3] : memref<2x32xf32, #tpu.memory_space<vmem>>, vector<2x32xf32>
    %c0_i32_4 = arith.constant 0 : i32
    %5 = arith.index_cast %c0_i32_4 : i32 to index
    %c0_5 = arith.constant 0 : index
    %c0_6 = arith.constant 0 : index
    %6 = vector.load %arg1[%5, %c0_5, %c0_6] : memref<8x2x32xf32, #tpu.memory_space<vmem>>, vector<1x2x32xf32>
    %7 = vector.shape_cast %6 : vector<1x2x32xf32> to vector<2x32xf32>
    %cst = arith.constant dense<0.000000e+00> : vector<2x32xf32>
    %8 = tpu.matmul %4, %3, %cst {dimension_numbers = #tpu.dot_dimension_numbers<[1], [0], [0], [1], [0, 0, 1, 1], [], []>} : vector<2x32xf32>, vector<32x32xf32>, vector<2x32xf32> -> vector<2x32xf32>
    %9 = arith.addf %7, %8 : vector<2x32xf32>
    %10 = math.tanh %9 : vector<2x32xf32>
    %11 = arith.index_cast %c0_i32_4 : i32 to index
    %c0_7 = arith.constant 0 : index
    %c0_8 = arith.constant 0 : index
    %12 = vector.load %arg3[%11, %c0_7, %c0_8] : memref<8x2x32xf32, #tpu.memory_space<vmem>>, vector<1x2x32xf32>
    %13 = vector.shape_cast %12 : vector<1x2x32xf32> to vector<2x32xf32>
    %14 = vector.shape_cast %10 : vector<2x32xf32> to vector<1x2x32xf32>
    tpu.vector_store %arg3[%11, %c0_7, %c0_8], %14 {strides = array<i32>} : memref<8x2x32xf32, #tpu.memory_space<vmem>>, vector<1x2x32xf32>,
    %c1_i32 = arith.constant 1 : i32
    %15 = arith.index_cast %c1_i32 : i32 to index
    %c0_9 = arith.constant 0 : index
    %c0_10 = arith.constant 0 : index
    %16 = vector.load %arg1[%15, %c0_9, %c0_10] : memref<8x2x32xf32, #tpu.memory_space<vmem>>, vector<1x2x32xf32>
    %17 = vector.shape_cast %16 : vector<1x2x32xf32> to vector<2x32xf32>
    %cst_11 = arith.constant dense<0.000000e+00> : vector<2x32xf32>
    %18 = tpu.matmul %10, %3, %cst_11 {dimension_numbers = #tpu.dot_dimension_numbers<[1], [0], [0], [1], [0, 0, 1, 1], [], []>} : vector<2x32xf32>, vector<32x32xf32>, vector<2x32xf32> -> vector<2x32xf32>
    %19 = arith.addf %17, %18 : vector<2x32xf32>
    %20 = math.tanh %19 : vector<2x32xf32>
    %21 = arith.index_cast %c1_i32 : i32 to index
    %c0_12 = arith.constant 0 : index
    %c0_13 = arith.constant 0 : index
    %22 = vector.load %arg3[%21, %c0_12, %c0_13] : memref<8x2x32xf32, #tpu.memory_space<vmem>>, vector<1x2x32xf32>
    %23 = vector.shape_cast %22 : vector<1x2x32xf32> to vector<2x32xf32>
    %24 = vector.shape_cast %20 : vector<2x32xf32> to vector<1x2x32xf32>
    tpu.vector_store %arg3[%21, %c0_12, %c0_13], %24 {strides = array<i32>} : memref<8x2x32xf32, #tpu.memory_space<vmem>>, vector<1x2x32xf32>,
    %c2_i32 = arith.constant 2 : i32
    %25 = arith.index_cast %c2_i32 : i32 to index
    %c0_14 = arith.constant 0 : index
    %c0_15 = arith.constant 0 : index
    %26 = vector.load %arg1[%25, %c0_14, %c0_15] : memref<8x2x32xf32, #tpu.memory_space<vmem>>, vector<1x2x32xf32>
    %27 = vector.shape_cast %26 : vector<1x2x32xf32> to vector<2x32xf32>
    %cst_16 = arith.constant dense<0.000000e+00> : vector<2x32xf32>
    %28 = tpu.matmul %20, %3, %cst_16 {dimension_numbers = #tpu.dot_dimension_numbers<[1], [0], [0], [1], [0, 0, 1, 1], [], []>} : vector<2x32xf32>, vector<32x32xf32>, vector<2x32xf32> -> vector<2x32xf32>
    %29 = arith.addf %27, %28 : vector<2x32xf32>
    %30 = math.tanh %29 : vector<2x32xf32>
    %31 = arith.index_cast %c2_i32 : i32 to index
    %c0_17 = arith.constant 0 : index
    %c0_18 = arith.constant 0 : index
    %32 = vector.load %arg3[%31, %c0_17, %c0_18] : memref<8x2x32xf32, #tpu.memory_space<vmem>>, vector<1x2x32xf32>
    %33 = vector.shape_cast %32 : vector<1x2x32xf32> to vector<2x32xf32>
    %34 = vector.shape_cast %30 : vector<2x32xf32> to vector<1x2x32xf32>
    tpu.vector_store %arg3[%31, %c0_17, %c0_18], %34 {strides = array<i32>} : memref<8x2x32xf32, #tpu.memory_space<vmem>>, vector<1x2x32xf32>,
    %c3_i32 = arith.constant 3 : i32
    %35 = arith.index_cast %c3_i32 : i32 to index
    %c0_19 = arith.constant 0 : index
    %c0_20 = arith.constant 0 : index
    %36 = vector.load %arg1[%35, %c0_19, %c0_20] : memref<8x2x32xf32, #tpu.memory_space<vmem>>, vector<1x2x32xf32>
    %37 = vector.shape_cast %36 : vector<1x2x32xf32> to vector<2x32xf32>
    %cst_21 = arith.constant dense<0.000000e+00> : vector<2x32xf32>
    %38 = tpu.matmul %30, %3, %cst_21 {dimension_numbers = #tpu.dot_dimension_numbers<[1], [0], [0], [1], [0, 0, 1, 1], [], []>} : vector<2x32xf32>, vector<32x32xf32>, vector<2x32xf32> -> vector<2x32xf32>
    %39 = arith.addf %37, %38 : vector<2x32xf32>
    %40 = math.tanh %39 : vector<2x32xf32>
    %41 = arith.index_cast %c3_i32 : i32 to index
    %c0_22 = arith.constant 0 : index
    %c0_23 = arith.constant 0 : index
    %42 = vector.load %arg3[%41, %c0_22, %c0_23] : memref<8x2x32xf32, #tpu.memory_space<vmem>>, vector<1x2x32xf32>
    %43 = vector.shape_cast %42 : vector<1x2x32xf32> to vector<2x32xf32>
    %44 = vector.shape_cast %40 : vector<2x32xf32> to vector<1x2x32xf32>
    tpu.vector_store %arg3[%41, %c0_22, %c0_23], %44 {strides = array<i32>} : memref<8x2x32xf32, #tpu.memory_space<vmem>>, vector<1x2x32xf32>,
    %c4_i32 = arith.constant 4 : i32
    %45 = arith.index_cast %c4_i32 : i32 to index
    %c0_24 = arith.constant 0 : index
    %c0_25 = arith.constant 0 : index
    %46 = vector.load %arg1[%45, %c0_24, %c0_25] : memref<8x2x32xf32, #tpu.memory_space<vmem>>, vector<1x2x32xf32>
    %47 = vector.shape_cast %46 : vector<1x2x32xf32> to vector<2x32xf32>
    %cst_26 = arith.constant dense<0.000000e+00> : vector<2x32xf32>
    %48 = tpu.matmul %40, %3, %cst_26 {dimension_numbers = #tpu.dot_dimension_numbers<[1], [0], [0], [1], [0, 0, 1, 1], [], []>} : vector<2x32xf32>, vector<32x32xf32>, vector<2x32xf32> -> vector<2x32xf32>
    %49 = arith.addf %47, %48 : vector<2x32xf32>
    %50 = math.tanh %49 : vector<2x32xf32>
    %51 = arith.index_cast %c4_i32 : i32 to index
    %c0_27 = arith.constant 0 : index
    %c0_28 = arith.constant 0 : index
    %52 = vector.load %arg3[%51, %c0_27, %c0_28] : memref<8x2x32xf32, #tpu.memory_space<vmem>>, vector<1x2x32xf32>
    %53 = vector.shape_cast %52 : vector<1x2x32xf32> to vector<2x32xf32>
    %54 = vector.shape_cast %50 : vector<2x32xf32> to vector<1x2x32xf32>
    tpu.vector_store %arg3[%51, %c0_27, %c0_28], %54 {strides = array<i32>} : memref<8x2x32xf32, #tpu.memory_space<vmem>>, vector<1x2x32xf32>,
    %c5_i32 = arith.constant 5 : i32
    %55 = arith.index_cast %c5_i32 : i32 to index
    %c0_29 = arith.constant 0 : index
    %c0_30 = arith.constant 0 : index
    %56 = vector.load %arg1[%55, %c0_29, %c0_30] : memref<8x2x32xf32, #tpu.memory_space<vmem>>, vector<1x2x32xf32>
    %57 = vector.shape_cast %56 : vector<1x2x32xf32> to vector<2x32xf32>
    %cst_31 = arith.constant dense<0.000000e+00> : vector<2x32xf32>
    %58 = tpu.matmul %50, %3, %cst_31 {dimension_numbers = #tpu.dot_dimension_numbers<[1], [0], [0], [1], [0, 0, 1, 1], [], []>} : vector<2x32xf32>, vector<32x32xf32>, vector<2x32xf32> -> vector<2x32xf32>
    %59 = arith.addf %57, %58 : vector<2x32xf32>
    %60 = math.tanh %59 : vector<2x32xf32>
    %61 = arith.index_cast %c5_i32 : i32 to index
    %c0_32 = arith.constant 0 : index
    %c0_33 = arith.constant 0 : index
    %62 = vector.load %arg3[%61, %c0_32, %c0_33] : memref<8x2x32xf32, #tpu.memory_space<vmem>>, vector<1x2x32xf32>
    %63 = vector.shape_cast %62 : vector<1x2x32xf32> to vector<2x32xf32>
    %64 = vector.shape_cast %60 : vector<2x32xf32> to vector<1x2x32xf32>
    tpu.vector_store %arg3[%61, %c0_32, %c0_33], %64 {strides = array<i32>} : memref<8x2x32xf32, #tpu.memory_space<vmem>>, vector<1x2x32xf32>,
    %c6_i32 = arith.constant 6 : i32
    %65 = arith.index_cast %c6_i32 : i32 to index
    %c0_34 = arith.constant 0 : index
    %c0_35 = arith.constant 0 : index
    %66 = vector.load %arg1[%65, %c0_34, %c0_35] : memref<8x2x32xf32, #tpu.memory_space<vmem>>, vector<1x2x32xf32>
    %67 = vector.shape_cast %66 : vector<1x2x32xf32> to vector<2x32xf32>
    %cst_36 = arith.constant dense<0.000000e+00> : vector<2x32xf32>
    %68 = tpu.matmul %60, %3, %cst_36 {dimension_numbers = #tpu.dot_dimension_numbers<[1], [0], [0], [1], [0, 0, 1, 1], [], []>} : vector<2x32xf32>, vector<32x32xf32>, vector<2x32xf32> -> vector<2x32xf32>
    %69 = arith.addf %67, %68 : vector<2x32xf32>
    %70 = math.tanh %69 : vector<2x32xf32>
    %71 = arith.index_cast %c6_i32 : i32 to index
    %c0_37 = arith.constant 0 : index
    %c0_38 = arith.constant 0 : index
    %72 = vector.load %arg3[%71, %c0_37, %c0_38] : memref<8x2x32xf32, #tpu.memory_space<vmem>>, vector<1x2x32xf32>
    %73 = vector.shape_cast %72 : vector<1x2x32xf32> to vector<2x32xf32>
    %74 = vector.shape_cast %70 : vector<2x32xf32> to vector<1x2x32xf32>
    tpu.vector_store %arg3[%71, %c0_37, %c0_38], %74 {strides = array<i32>} : memref<8x2x32xf32, #tpu.memory_space<vmem>>, vector<1x2x32xf32>,
    %c7_i32 = arith.constant 7 : i32
    %75 = arith.index_cast %c7_i32 : i32 to index
    %c0_39 = arith.constant 0 : index
    %c0_40 = arith.constant 0 : index
    %76 = vector.load %arg1[%75, %c0_39, %c0_40] : memref<8x2x32xf32, #tpu.memory_space<vmem>>, vector<1x2x32xf32>
    %77 = vector.shape_cast %76 : vector<1x2x32xf32> to vector<2x32xf32>
    %cst_41 = arith.constant dense<0.000000e+00> : vector<2x32xf32>
    %78 = tpu.matmul %70, %3, %cst_41 {dimension_numbers = #tpu.dot_dimension_numbers<[1], [0], [0], [1], [0, 0, 1, 1], [], []>} : vector<2x32xf32>, vector<32x32xf32>, vector<2x32xf32> -> vector<2x32xf32>
    %79 = arith.addf %77, %78 : vector<2x32xf32>
    %80 = math.tanh %79 : vector<2x32xf32>
    %81 = arith.index_cast %c7_i32 : i32 to index
    %c0_42 = arith.constant 0 : index
    %c0_43 = arith.constant 0 : index
    %82 = vector.load %arg3[%81, %c0_42, %c0_43] : memref<8x2x32xf32, #tpu.memory_space<vmem>>, vector<1x2x32xf32>
    %83 = vector.shape_cast %82 : vector<1x2x32xf32> to vector<2x32xf32>
    %84 = vector.shape_cast %80 : vector<2x32xf32> to vector<1x2x32xf32>
    tpu.vector_store %arg3[%81, %c0_42, %c0_43], %84 {strides = array<i32>} : memref<8x2x32xf32, #tpu.memory_space<vmem>>, vector<1x2x32xf32>,
    %c8_i32 = arith.constant 8 : i32
    %c0_44 = arith.constant 0 : index
    %c0_45 = arith.constant 0 : index
    %85 = vector.load %arg4[%c0_44, %c0_45] : memref<2x32xf32, #tpu.memory_space<vmem>>, vector<2x32xf32>
    tpu.vector_store %arg4[%c0_44, %c0_45], %80 {strides = array<i32>} : memref<2x32xf32, #tpu.memory_space<vmem>>, vector<2x32xf32>,
    return
  }
  func.func @transform_0(%arg0: i32) -> (i32, i32, i32) {
    %c0_i32 = arith.constant 0 : i32
    %c0_i32_0 = arith.constant 0 : i32
    %c0_i32_1 = arith.constant 0 : i32
    return %arg0, %c0_i32, %c0_i32_0 : i32, i32, i32
  }
  func.func @transform_1(%arg0: i32) -> (i32, i32) {
    %c0_i32 = arith.constant 0 : i32
    %c0_i32_0 = arith.constant 0 : i32
    %c0_i32_1 = arith.constant 0 : i32
    return %c0_i32, %c0_i32_0 : i32, i32
  }
  func.func @transform_2(%arg0: i32) -> (i32, i32, i32) {
    %c0_i32 = arith.constant 0 : i32
    %c0_i32_0 = arith.constant 0 : i32
    %c0_i32_1 = arith.constant 0 : i32
    return %arg0, %c0_i32, %c0_i32_0 : i32, i32, i32
  }
}

</mosaic_0001>

<llo_original>
// kernel: tpu_custom_call.1
$region0: #{tpu_custom_call.1}
  #allocation0 [shape = 'u32[]', space=smem, size = 0x4, offset = 0x4, fixed_abs, tag = 'smem constant byte address 0x4 - core index']
  #allocation1 [shape = 'u32[144,128]{1,0:T(1,128)}', space=vmem, size = 0x12000, scoped, tag = 'internal scratch']
  #allocation2 [shape = 'f32[2,32]{1,0:T(2,128)}', space=vmem, size = 0x400, scoped, tag = 'scratch operand']
  %s0 = inlined_call_operand.hbm [shape: f32[8,2,32], index: 0, kind: input, shape index: {}]
  %s1 = inlined_call_operand.hbm [shape: f32[32,32], index: 1, kind: input, shape index: {}]
  %s2 = inlined_call_operand.hbm [shape: f32[8,2,32], index: 2, kind: output, shape index: {}]
  %s3 = sld [smem:[#allocation0]]
  $region30: #{tpu_custom_call.1} parent=0
    _
  %s5 = ssub.s32 1, %s3
  %s6 = scalar_select 0, %s5, %s3
  $region1: #{tpu_custom_call.1} parent=0
    #allocation3 [shape = 'u8[8192]{0}', space=vmem, size = 0x2000, scoped, tag = 'input window, operand 0, single buffered']
    #allocation4 [shape = 's32[1]{0}', space=sflag, size = 0x4, scoped, tag = 'scoped memory for tpu_custom_call.1']
    #allocation5 [shape = 's32[1]{0}', space=sflag, size = 0x4, scoped, tag = 'scoped memory for tpu_custom_call.1']
    #allocation6 [shape = 'u8[16384]{0}', space=vmem, size = 0x4000, scoped, tag = 'input window, operand 1, single buffered']
    #allocation7 [shape = 's32[1]{0}', space=sflag, size = 0x4, scoped, tag = 'scoped memory for tpu_custom_call.1']
    #allocation8 [shape = 'u8[8192]{0}', space=vmem, size = 0x2000, scoped, tag = 'output window, operand 0, single buffered']
    %7 = vsyncpa [#allocation4], 0
    %8 = vsyncpa [#allocation7], 0
    %9 = vsyncpa [#allocation5], 0
    // Predicated region
    $region2: #{tpu_custom_call.1} parent=1 // pred_check
      _
    $region3: #{tpu_custom_call.1} parent=1 // pred_check_branch
      %11 = sbr.rel (0) target = $region5
    $region4: #{tpu_custom_call.1} parent=1 // pred_region
      %s13 = ssub.s32 256, 256
      %14 = vsyncadd [#allocation4], %s13
      %s15 = sshll.u32 [#allocation3], 4
      %s16 = int_to_ptr.vmem [resolvable:$true] %s15
      %21 = dma.hbm_to_vmem [thread:$0]  %s0, 256, %s16, [#allocation4], 32, 32, 2
    $region5: #{tpu_custom_call.1} parent=1 // pred_fallthru
      _
    // Predicated region
    $region6: #{tpu_custom_call.1} parent=1 // pred_check
      _
    $region7: #{tpu_custom_call.1} parent=1 // pred_check_branch
      %23 = sbr.rel (0) target = $region9
    $region8: #{tpu_custom_call.1} parent=1 // pred_region
      %s25 = ssub.s32 512, 512
      %26 = vsyncadd [#allocation7], %s25
      %s27 = sshll.u32 [#allocation6], 4
      %s28 = int_to_ptr.vmem [resolvable:$true] %s27
      %33 = dma.hbm_to_vmem [thread:$0]  %s1, 512, %s28, [#allocation7], 128, 128, 8
    $region9: #{tpu_custom_call.1} parent=1 // pred_fallthru
      _
    // Predicated region
    $region10: #{tpu_custom_call.1} parent=1 // pred_check
      _
    $region11: #{tpu_custom_call.1} parent=1 // pred_check_branch
      %35 = sbr.rel (0) target = $region13
    $region12: #{tpu_custom_call.1} parent=1 // pred_region
      %36 = dma.done [#allocation4], 256
    $region13: #{tpu_custom_call.1} parent=1 // pred_fallthru
      _
    // Predicated region
    $region14: #{tpu_custom_call.1} parent=1 // pred_check
      _
    $region15: #{tpu_custom_call.1} parent=1 // pred_check_branch
      %38 = sbr.rel (0) target = $region17
    $region16: #{tpu_custom_call.1} parent=1 // pred_region
      %39 = dma.done [#allocation7], 512
    $region17: #{tpu_custom_call.1} parent=1 // pred_fallthru
      _
    %p40 = scmp.eq.s32.totalorder 0, 0
    // Predicated region
    $region18: #{tpu_custom_call.1} parent=1 // pred_check
      %p41 = pneg %p40
    $region19: #{tpu_custom_call.1} parent=1 // pred_check_branch
      %43 = sbr.rel (%p41) target = $region21
    $region20: #{tpu_custom_call.1} parent=1 // pred_region
      %vm44 = vcmask 254976
      %45 = vst.msk [vmem:[#allocation2] sm:$0x3] %vm44, 0.0
    $region21: #{tpu_custom_call.1} parent=1 // pred_fallthru
      _
    %v46 = vld [vmem:[#allocation6] sm:$0xff]
    %v47 = vld [vmem:[#allocation6 + $0x8] sm:$0xff]
    %v48 = vld [vmem:[#allocation6 + $0x10] sm:$0xff]
    %v49 = vld [vmem:[#allocation6 + $0x18] sm:$0xff]
    %v50 = vld [vmem:[#allocation2] sm:$0x3]
    %v51 = vld [vmem:[#allocation3] sm:$0x3]
    %vm52 = vcmask 261120
    %v54 = vsel %vm52, %v50, 0
    %56 = vmatprep.subr.mxu0 0.0
    %57 = vmatpush1.msra.mxu0 %v46
    %58 = vmatprep.subr.mxu0 0.0
    %59 = vmatpush1.msra.mxu0 %v47
    %60 = vmatprep.subr.mxu0 0.0
    %61 = vmatpush1.msra.mxu0 %v48
    %62 = vmatprep.subr.mxu0 0.0
    %63 = vmatpush1.msra.mxu0 %v49
    %64 = vmatprep.subr.mxu0 0.0
    %65 = vmatpush1.msra.mxu0 0.0
    %66 = vmatprep.subr.mxu0 0.0
    %67 = vmatpush1.msra.mxu0 0.0
    %68 = vmatprep.subr.mxu0 0.0
    %69 = vmatpush1.msra.mxu0 0.0
    %70 = vmatprep.subr.mxu0 0.0
    %71 = vmatpush1.msra.mxu0 0.0
    %72 = vmatprep.subr.mxu0 0.0
    %73 = vmatpush1.msra.mxu0 0.0
    %74 = vmatprep.subr.mxu0 0.0
    %75 = vmatpush1.msra.mxu0 0.0
    %76 = vmatprep.subr.mxu0 0.0
    %77 = vmatpush1.msra.mxu0 0.0
    %78 = vmatprep.subr.mxu0 0.0
    %79 = vmatpush1.msra.mxu0 0.0
    %80 = vmatprep.subr.mxu0 0.0
    %81 = vmatpush1.msra.mxu0 0.0
    %82 = vmatprep.subr.mxu0 0.0
    %83 = vmatpush1.msra.mxu0 0.0
    %84 = vmatprep.subr.mxu0 0.0
    %85 = vmatpush1.msra.mxu0 0.0
    %86 = vmatprep.subr.mxu0 0.0
    %87 = vmatpush1.msra.mxu0 0.0
    %88 = vmatprep.subr.mxu0 0.0
    %89 = vmatpush1.msra.mxu0 0.0
    %90 = vmatprep.subr.mxu0 0.0
    %91 = vmatpush1.msra.mxu0 0.0
    %92 = vmatprep.subr.mxu0 0.0
    %93 = vmatpush1.msra.mxu0 0.0
    %94 = vmatprep.subr.mxu0 0.0
    %95 = vmatpush1.msra.mxu0 0.0
    %96 = vmatprep.subr.mxu0 0.0
    %97 = vmatpush1.msra.mxu0 0.0
    %98 = vmatprep.subr.mxu0 0.0
    %99 = vmatpush1.msra.mxu0 0.0
    %100 = vmatprep.subr.mxu0 0.0
    %101 = vmatpush1.msra.mxu0 0.0
    %102 = vmatprep.subr.mxu0 0.0
    %103 = vmatpush1.msra.mxu0 0.0
    %104 = vmatprep.subr.mxu0 0.0
    %105 = vmatpush1.msra.mxu0 0.0
    %106 = vmatprep.subr.mxu0 0.0
    %107 = vmatpush1.msra.mxu0 0.0
    %108 = vmatprep.subr.mxu0 0.0
    %109 = vmatpush1.msra.mxu0 0.0
    %110 = vmatprep.subr.mxu0 0.0
    %111 = vmatpush1.msra.mxu0 0.0
    %112 = vmatprep.subr.mxu0 0.0
    %113 = vmatpush1.msra.mxu0 0.0
    %114 = vmatprep.subr.mxu0 0.0
    %115 = vmatpush1.msra.mxu0 0.0
    %116 = vmatprep.subr.mxu0 0.0
    %117 = vmatpush1.msra.mxu0 0.0
    %118 = vmatprep.subr.mxu0 0.0
    %119 = vmatpush1.msra.mxu0 0.0
    %120 = vmatprep.mubr.f32.mxu0 0.0
    %121 = vmatmul.mubr.f32.gmra.mrb[0].mxu0 %v54
    %v122 = vpop.f32.mrb[0].mxu0
    %v123 = vadd.f32 0.0, %v122
    %v124 = vpop.f32.mrb[0].mxu0
    %125 = vdwg.mxu0
    %v126 = vadd.f32 %v51, %v123
    %v127 = vtanh.pop %v126
    %vm128 = vcmask 254976
    %129 = vst.msk [vmem:[#allocation8] sm:$0x3] %vm128, %v127
    %s130 = scalar_lea.vmem [#allocation3], 2
    %v131 = vld [vmem:[%s130] sm:$0x3]
    %v133 = vsel %vm52, %v127, 0
    %135 = vmatprep.subr.mxu0 0.0
    %136 = vmatpush1.msra.mxu0 %v46
    %137 = vmatprep.subr.mxu0 0.0
    %138 = vmatpush1.msra.mxu0 %v47
    %139 = vmatprep.subr.mxu0 0.0
    %140 = vmatpush1.msra.mxu0 %v48
    %141 = vmatprep.subr.mxu0 0.0
    %142 = vmatpush1.msra.mxu0 %v49
    %143 = vmatprep.subr.mxu0 0.0
    %144 = vmatpush1.msra.mxu0 0.0
    %145 = vmatprep.subr.mxu0 0.0
    %146 = vmatpush1.msra.mxu0 0.0
    %147 = vmatprep.subr.mxu0 0.0
    %148 = vmatpush1.msra.mxu0 0.0
    %149 = vmatprep.subr.mxu0 0.0
    %150 = vmatpush1.msra.mxu0 0.0
    %151 = vmatprep.subr.mxu0 0.0
    %152 = vmatpush1.msra.mxu0 0.0
    %153 = vmatprep.subr.mxu0 0.0
    %154 = vmatpush1.msra.mxu0 0.0
    %155 = vmatprep.subr.mxu0 0.0
    %156 = vmatpush1.msra.mxu0 0.0
    %157 = vmatprep.subr.mxu0 0.0
    %158 = vmatpush1.msra.mxu0 0.0
    %159 = vmatprep.subr.mxu0 0.0
    %160 = vmatpush1.msra.mxu0 0.0
    %161 = vmatprep.subr.mxu0 0.0
    %162 = vmatpush1.msra.mxu0 0.0
    %163 = vmatprep.subr.mxu0 0.0
    %164 = vmatpush1.msra.mxu0 0.0
    %165 = vmatprep.subr.mxu0 0.0
    %166 = vmatpush1.msra.mxu0 0.0
    %167 = vmatprep.subr.mxu0 0.0
    %168 = vmatpush1.msra.mxu0 0.0
    %169 = vmatprep.subr.mxu0 0.0
    %170 = vmatpush1.msra.mxu0 0.0
    %171 = vmatprep.subr.mxu0 0.0
    %172 = vmatpush1.msra.mxu0 0.0
    %173 = vmatprep.subr.mxu0 0.0
    %174 = vmatpush1.msra.mxu0 0.0
    %175 = vmatprep.subr.mxu0 0.0
    %176 = vmatpush1.msra.mxu0 0.0
    %177 = vmatprep.subr.mxu0 0.0
    %178 = vmatpush1.msra.mxu0 0.0
    %179 = vmatprep.subr.mxu0 0.0
    %180 = vmatpush1.msra.mxu0 0.0
    %181 = vmatprep.subr.mxu0 0.0
    %182 = vmatpush1.msra.mxu0 0.0
    %183 = vmatprep.subr.mxu0 0.0
    %184 = vmatpush1.msra.mxu0 0.0
    %185 = vmatprep.subr.mxu0 0.0
    %186 = vmatpush1.msra.mxu0 0.0
    %187 = vmatprep.subr.mxu0 0.0
    %188 = vmatpush1.msra.mxu0 0.0
    %189 = vmatprep.subr.mxu0 0.0
    %190 = vmatpush1.msra.mxu0 0.0
    %191 = vmatprep.subr.mxu0 0.0
    %192 = vmatpush1.msra.mxu0 0.0
    %193 = vmatprep.subr.mxu0 0.0
    %194 = vmatpush1.msra.mxu0 0.0
    %195 = vmatprep.subr.mxu0 0.0
    %196 = vmatpush1.msra.mxu0 0.0
    %197 = vmatprep.subr.mxu0 0.0
    %198 = vmatpush1.msra.mxu0 0.0
    %199 = vmatprep.mubr.f32.mxu0 0.0
    %200 = vmatmul.mubr.f32.gmra.mrb[0].mxu0 %v133
    %v201 = vpop.f32.mrb[0].mxu0
    %v202 = vadd.f32 0.0, %v201
    %v203 = vpop.f32.mrb[0].mxu0
    %204 = vdwg.mxu0
    %v205 = vadd.f32 %v131, %v202
    %v206 = vtanh.pop %v205
    %s207 = scalar_lea.vmem [#allocation8], 2
    %208 = vst.msk [vmem:[%s207] sm:$0x3] %vm128, %v206
    %s209 = scalar_lea.vmem [#allocation3], 4
    %v210 = vld [vmem:[%s209] sm:$0x3]
    %v212 = vsel %vm52, %v206, 0
    %214 = vmatprep.subr.mxu0 0.0
    %215 = vmatpush1.msra.mxu0 %v46
    %216 = vmatprep.subr.mxu0 0.0
    %217 = vmatpush1.msra.mxu0 %v47
    %218 = vmatprep.subr.mxu0 0.0
    %219 = vmatpush1.msra.mxu0 %v48
    %220 = vmatprep.subr.mxu0 0.0
    %221 = vmatpush1.msra.mxu0 %v49
    %222 = vmatprep.subr.mxu0 0.0
    %223 = vmatpush1.msra.mxu0 0.0
    %224 = vmatprep.subr.mxu0 0.0
    %225 = vmatpush1.msra.mxu0 0.0
    %226 = vmatprep.subr.mxu0 0.0
    %227 = vmatpush1.msra.mxu0 0.0
    %228 = vmatprep.subr.mxu0 0.0
    %229 = vmatpush1.msra.mxu0 0.0
    %230 = vmatprep.subr.mxu0 0.0
    %231 = vmatpush1.msra.mxu0 0.0
    %232 = vmatprep.subr.mxu0 0.0
    %233 = vmatpush1.msra.mxu0 0.0
    %234 = vmatprep.subr.mxu0 0.0
    %235 = vmatpush1.msra.mxu0 0.0
    %236 = vmatprep.subr.mxu0 0.0
    %237 = vmatpush1.msra.mxu0 0.0
    %238 = vmatprep.subr.mxu0 0.0
    %239 = vmatpush1.msra.mxu0 0.0
    %240 = vmatprep.subr.mxu0 0.0
    %241 = vmatpush1.msra.mxu0 0.0
    %242 = vmatprep.subr.mxu0 0.0
    %243 = vmatpush1.msra.mxu0 0.0
    %244 = vmatprep.subr.mxu0 0.0
    %245 = vmatpush1.msra.mxu0 0.0
    %246 = vmatprep.subr.mxu0 0.0
    %247 = vmatpush1.msra.mxu0 0.0
    %248 = vmatprep.subr.mxu0 0.0
    %249 = vmatpush1.msra.mxu0 0.0
    %250 = vmatprep.subr.mxu0 0.0
    %251 = vmatpush1.msra.mxu0 0.0
    %252 = vmatprep.subr.mxu0 0.0
    %253 = vmatpush1.msra.mxu0 0.0
    %254 = vmatprep.subr.mxu0 0.0
    %255 = vmatpush1.msra.mxu0 0.0
    %256 = vmatprep.subr.mxu0 0.0
    %257 = vmatpush1.msra.mxu0 0.0
    %258 = vmatprep.subr.mxu0 0.0
    %259 = vmatpush1.msra.mxu0 0.0
    %260 = vmatprep.subr.mxu0 0.0
    %261 = vmatpush1.msra.mxu0 0.0
    %262 = vmatprep.subr.mxu0 0.0
    %263 = vmatpush1.msra.mxu0 0.0
    %264 = vmatprep.subr.mxu0 0.0
    %265 = vmatpush1.msra.mxu0 0.0
    %266 = vmatprep.subr.mxu0 0.0
    %267 = vmatpush1.msra.mxu0 0.0
    %268 = vmatprep.subr.mxu0 0.0
    %269 = vmatpush1.msra.mxu0 0.0
    %270 = vmatprep.subr.mxu0 0.0
    %271 = vmatpush1.msra.mxu0 0.0
    %272 = vmatprep.subr.mxu0 0.0
    %273 = vmatpush1.msra.mxu0 0.0
    %274 = vmatprep.subr.mxu0 0.0
    %275 = vmatpush1.msra.mxu0 0.0
    %276 = vmatprep.subr.mxu0 0.0
    %277 = vmatpush1.msra.mxu0 0.0
    %278 = vmatprep.mubr.f32.mxu0 0.0
    %279 = vmatmul.mubr.f32.gmra.mrb[0].mxu0 %v212
    %v280 = vpop.f32.mrb[0].mxu0
    %v281 = vadd.f32 0.0, %v280
    %v282 = vpop.f32.mrb[0].mxu0
    %283 = vdwg.mxu0
    %v284 = vadd.f32 %v210, %v281
    %v285 = vtanh.pop %v284
    %s286 = scalar_lea.vmem [#allocation8], 4
    %287 = vst.msk [vmem:[%s286] sm:$0x3] %vm128, %v285
    %s288 = scalar_lea.vmem [#allocation3], 6
    %v289 = vld [vmem:[%s288] sm:$0x3]
    %v291 = vsel %vm52, %v285, 0
    %293 = vmatprep.subr.mxu0 0.0
    %294 = vmatpush1.msra.mxu0 %v46
    %295 = vmatprep.subr.mxu0 0.0
    %296 = vmatpush1.msra.mxu0 %v47
    %297 = vmatprep.subr.mxu0 0.0
    %298 = vmatpush1.msra.mxu0 %v48
    %299 = vmatprep.subr.mxu0 0.0
    %300 = vmatpush1.msra.mxu0 %v49
    %301 = vmatprep.subr.mxu0 0.0
    %302 = vmatpush1.msra.mxu0 0.0
    %303 = vmatprep.subr.mxu0 0.0
    %304 = vmatpush1.msra.mxu0 0.0
    %305 = vmatprep.subr.mxu0 0.0
    %306 = vmatpush1.msra.mxu0 0.0
    %307 = vmatprep.subr.mxu0 0.0
    %308 = vmatpush1.msra.mxu0 0.0
    %309 = vmatprep.subr.mxu0 0.0
    %310 = vmatpush1.msra.mxu0 0.0
    %311 = vmatprep.subr.mxu0 0.0
    %312 = vmatpush1.msra.mxu0 0.0
    %313 = vmatprep.subr.mxu0 0.0
    %314 = vmatpush1.msra.mxu0 0.0
    %315 = vmatprep.subr.mxu0 0.0
    %316 = vmatpush1.msra.mxu0 0.0
    %317 = vmatprep.subr.mxu0 0.0
    %318 = vmatpush1.msra.mxu0 0.0
    %319 = vmatprep.subr.mxu0 0.0
    %320 = vmatpush1.msra.mxu0 0.0
    %321 = vmatprep.subr.mxu0 0.0
    %322 = vmatpush1.msra.mxu0 0.0
    %323 = vmatprep.subr.mxu0 0.0
    %324 = vmatpush1.msra.mxu0 0.0
    %325 = vmatprep.subr.mxu0 0.0
    %326 = vmatpush1.msra.mxu0 0.0
    %327 = vmatprep.subr.mxu0 0.0
    %328 = vmatpush1.msra.mxu0 0.0
    %329 = vmatprep.subr.mxu0 0.0
    %330 = vmatpush1.msra.mxu0 0.0
    %331 = vmatprep.subr.mxu0 0.0
    %332 = vmatpush1.msra.mxu0 0.0
    %333 = vmatprep.subr.mxu0 0.0
    %334 = vmatpush1.msra.mxu0 0.0
    %335 = vmatprep.subr.mxu0 0.0
    %336 = vmatpush1.msra.mxu0 0.0
    %337 = vmatprep.subr.mxu0 0.0
    %338 = vmatpush1.msra.mxu0 0.0
    %339 = vmatprep.subr.mxu0 0.0
    %340 = vmatpush1.msra.mxu0 0.0
    %341 = vmatprep.subr.mxu0 0.0
    %342 = vmatpush1.msra.mxu0 0.0
    %343 = vmatprep.subr.mxu0 0.0
    %344 = vmatpush1.msra.mxu0 0.0
    %345 = vmatprep.subr.mxu0 0.0
    %346 = vmatpush1.msra.mxu0 0.0
    %347 = vmatprep.subr.mxu0 0.0
    %348 = vmatpush1.msra.mxu0 0.0
    %349 = vmatprep.subr.mxu0 0.0
    %350 = vmatpush1.msra.mxu0 0.0
    %351 = vmatprep.subr.mxu0 0.0
    %352 = vmatpush1.msra.mxu0 0.0
    %353 = vmatprep.subr.mxu0 0.0
    %354 = vmatpush1.msra.mxu0 0.0
    %355 = vmatprep.subr.mxu0 0.0
    %356 = vmatpush1.msra.mxu0 0.0
    %357 = vmatprep.mubr.f32.mxu0 0.0
    %358 = vmatmul.mubr.f32.gmra.mrb[0].mxu0 %v291
    %v359 = vpop.f32.mrb[0].mxu0
    %v360 = vadd.f32 0.0, %v359
    %v361 = vpop.f32.mrb[0].mxu0
    %362 = vdwg.mxu0
    %v363 = vadd.f32 %v289, %v360
    %v364 = vtanh.pop %v363
    %s365 = scalar_lea.vmem [#allocation8], 6
    %366 = vst.msk [vmem:[%s365] sm:$0x3] %vm128, %v364
    %s367 = scalar_lea.vmem [#allocation3], 8
    %v368 = vld [vmem:[%s367] sm:$0x3]
    %v370 = vsel %vm52, %v364, 0
    %372 = vmatprep.subr.mxu0 0.0
    %373 = vmatpush1.msra.mxu0 %v46
    %374 = vmatprep.subr.mxu0 0.0
    %375 = vmatpush1.msra.mxu0 %v47
    %376 = vmatprep.subr.mxu0 0.0
    %377 = vmatpush1.msra.mxu0 %v48
    %378 = vmatprep.subr.mxu0 0.0
    %379 = vmatpush1.msra.mxu0 %v49
    %380 = vmatprep.subr.mxu0 0.0
    %381 = vmatpush1.msra.mxu0 0.0
    %382 = vmatprep.subr.mxu0 0.0
    %383 = vmatpush1.msra.mxu0 0.0
    %384 = vmatprep.subr.mxu0 0.0
    %385 = vmatpush1.msra.mxu0 0.0
    %386 = vmatprep.subr.mxu0 0.0
    %387 = vmatpush1.msra.mxu0 0.0
    %388 = vmatprep.subr.mxu0 0.0
    %389 = vmatpush1.msra.mxu0 0.0
    %390 = vmatprep.subr.mxu0 0.0
    %391 = vmatpush1.msra.mxu0 0.0
    %392 = vmatprep.subr.mxu0 0.0
    %393 = vmatpush1.msra.mxu0 0.0
    %394 = vmatprep.subr.mxu0 0.0
    %395 = vmatpush1.msra.mxu0 0.0
    %396 = vmatprep.subr.mxu0 0.0
    %397 = vmatpush1.msra.mxu0 0.0
    %398 = vmatprep.subr.mxu0 0.0
    %399 = vmatpush1.msra.mxu0 0.0
    %400 = vmatprep.subr.mxu0 0.0
    %401 = vmatpush1.msra.mxu0 0.0
    %402 = vmatprep.subr.mxu0 0.0
    %403 = vmatpush1.msra.mxu0 0.0
    %404 = vmatprep.subr.mxu0 0.0
    %405 = vmatpush1.msra.mxu0 0.0
    %406 = vmatprep.subr.mxu0 0.0
    %407 = vmatpush1.msra.mxu0 0.0
    %408 = vmatprep.subr.mxu0 0.0
    %409 = vmatpush1.msra.mxu0 0.0
    %410 = vmatprep.subr.mxu0 0.0
    %411 = vmatpush1.msra.mxu0 0.0
    %412 = vmatprep.subr.mxu0 0.0
    %413 = vmatpush1.msra.mxu0 0.0
    %414 = vmatprep.subr.mxu0 0.0
    %415 = vmatpush1.msra.mxu0 0.0
    %416 = vmatprep.subr.mxu0 0.0
    %417 = vmatpush1.msra.mxu0 0.0
    %418 = vmatprep.subr.mxu0 0.0
    %419 = vmatpush1.msra.mxu0 0.0
    %420 = vmatprep.subr.mxu0 0.0
    %421 = vmatpush1.msra.mxu0 0.0
    %422 = vmatprep.subr.mxu0 0.0
    %423 = vmatpush1.msra.mxu0 0.0
    %424 = vmatprep.subr.mxu0 0.0
    %425 = vmatpush1.msra.mxu0 0.0
    %426 = vmatprep.subr.mxu0 0.0
    %427 = vmatpush1.msra.mxu0 0.0
    %428 = vmatprep.subr.mxu0 0.0
    %429 = vmatpush1.msra.mxu0 0.0
    %430 = vmatprep.subr.mxu0 0.0
    %431 = vmatpush1.msra.mxu0 0.0
    %432 = vmatprep.subr.mxu0 0.0
    %433 = vmatpush1.msra.mxu0 0.0
    %434 = vmatprep.subr.mxu0 0.0
    %435 = vmatpush1.msra.mxu0 0.0
    %436 = vmatprep.mubr.f32.mxu0 0.0
    %437 = vmatmul.mubr.f32.gmra.mrb[0].mxu0 %v370
    %v438 = vpop.f32.mrb[0].mxu0
    %v439 = vadd.f32 0.0, %v438
    %v440 = vpop.f32.mrb[0].mxu0
    %441 = vdwg.mxu0
    %v442 = vadd.f32 %v368, %v439
    %v443 = vtanh.pop %v442
    %s444 = scalar_lea.vmem [#allocation8], 8
    %445 = vst.msk [vmem:[%s444] sm:$0x3] %vm128, %v443
    %s446 = scalar_lea.vmem [#allocation3], 10
    %v447 = vld [vmem:[%s446] sm:$0x3]
    %v449 = vsel %vm52, %v443, 0
    %451 = vmatprep.subr.mxu0 0.0
    %452 = vmatpush1.msra.mxu0 %v46
    %453 = vmatprep.subr.mxu0 0.0
    %454 = vmatpush1.msra.mxu0 %v47
    %455 = vmatprep.subr.mxu0 0.0
    %456 = vmatpush1.msra.mxu0 %v48
    %457 = vmatprep.subr.mxu0 0.0
    %458 = vmatpush1.msra.mxu0 %v49
    %459 = vmatprep.subr.mxu0 0.0
    %460 = vmatpush1.msra.mxu0 0.0
    %461 = vmatprep.subr.mxu0 0.0
    %462 = vmatpush1.msra.mxu0 0.0
    %463 = vmatprep.subr.mxu0 0.0
    %464 = vmatpush1.msra.mxu0 0.0
    %465 = vmatprep.subr.mxu0 0.0
    %466 = vmatpush1.msra.mxu0 0.0
    %467 = vmatprep.subr.mxu0 0.0
    %468 = vmatpush1.msra.mxu0 0.0
    %469 = vmatprep.subr.mxu0 0.0
    %470 = vmatpush1.msra.mxu0 0.0
    %471 = vmatprep.subr.mxu0 0.0
    %472 = vmatpush1.msra.mxu0 0.0
    %473 = vmatprep.subr.mxu0 0.0
    %474 = vmatpush1.msra.mxu0 0.0
    %475 = vmatprep.subr.mxu0 0.0
    %476 = vmatpush1.msra.mxu0 0.0
    %477 = vmatprep.subr.mxu0 0.0
    %478 = vmatpush1.msra.mxu0 0.0
    %479 = vmatprep.subr.mxu0 0.0
    %480 = vmatpush1.msra.mxu0 0.0
    %481 = vmatprep.subr.mxu0 0.0
    %482 = vmatpush1.msra.mxu0 0.0
    %483 = vmatprep.subr.mxu0 0.0
    %484 = vmatpush1.msra.mxu0 0.0
    %485 = vmatprep.subr.mxu0 0.0
    %486 = vmatpush1.msra.mxu0 0.0
    %487 = vmatprep.subr.mxu0 0.0
    %488 = vmatpush1.msra.mxu0 0.0
    %489 = vmatprep.subr.mxu0 0.0
    %490 = vmatpush1.msra.mxu0 0.0
    %491 = vmatprep.subr.mxu0 0.0
    %492 = vmatpush1.msra.mxu0 0.0
    %493 = vmatprep.subr.mxu0 0.0
    %494 = vmatpush1.msra.mxu0 0.0
    %495 = vmatprep.subr.mxu0 0.0
    %496 = vmatpush1.msra.mxu0 0.0
    %497 = vmatprep.subr.mxu0 0.0
    %498 = vmatpush1.msra.mxu0 0.0
    %499 = vmatprep.subr.mxu0 0.0
    %500 = vmatpush1.msra.mxu0 0.0
    %501 = vmatprep.subr.mxu0 0.0
    %502 = vmatpush1.msra.mxu0 0.0
    %503 = vmatprep.subr.mxu0 0.0
    %504 = vmatpush1.msra.mxu0 0.0
    %505 = vmatprep.subr.mxu0 0.0
    %506 = vmatpush1.msra.mxu0 0.0
    %507 = vmatprep.subr.mxu0 0.0
    %508 = vmatpush1.msra.mxu0 0.0
    %509 = vmatprep.subr.mxu0 0.0
    %510 = vmatpush1.msra.mxu0 0.0
    %511 = vmatprep.subr.mxu0 0.0
    %512 = vmatpush1.msra.mxu0 0.0
    %513 = vmatprep.subr.mxu0 0.0
    %514 = vmatpush1.msra.mxu0 0.0
    %515 = vmatprep.mubr.f32.mxu0 0.0
    %516 = vmatmul.mubr.f32.gmra.mrb[0].mxu0 %v449
    %v517 = vpop.f32.mrb[0].mxu0
    %v518 = vadd.f32 0.0, %v517
    %v519 = vpop.f32.mrb[0].mxu0
    %520 = vdwg.mxu0
    %v521 = vadd.f32 %v447, %v518
    %v522 = vtanh.pop %v521
    %s523 = scalar_lea.vmem [#allocation8], 10
    %524 = vst.msk [vmem:[%s523] sm:$0x3] %vm128, %v522
    %s525 = scalar_lea.vmem [#allocation3], 12
    %v526 = vld [vmem:[%s525] sm:$0x3]
    %v528 = vsel %vm52, %v522, 0
    %530 = vmatprep.subr.mxu0 0.0
    %531 = vmatpush1.msra.mxu0 %v46
    %532 = vmatprep.subr.mxu0 0.0
    %533 = vmatpush1.msra.mxu0 %v47
    %534 = vmatprep.subr.mxu0 0.0
    %535 = vmatpush1.msra.mxu0 %v48
    %536 = vmatprep.subr.mxu0 0.0
    %537 = vmatpush1.msra.mxu0 %v49
    %538 = vmatprep.subr.mxu0 0.0
    %539 = vmatpush1.msra.mxu0 0.0
    %540 = vmatprep.subr.mxu0 0.0
    %541 = vmatpush1.msra.mxu0 0.0
    %542 = vmatprep.subr.mxu0 0.0
    %543 = vmatpush1.msra.mxu0 0.0
    %544 = vmatprep.subr.mxu0 0.0
    %545 = vmatpush1.msra.mxu0 0.0
    %546 = vmatprep.subr.mxu0 0.0
    %547 = vmatpush1.msra.mxu0 0.0
    %548 = vmatprep.subr.mxu0 0.0
    %549 = vmatpush1.msra.mxu0 0.0
    %550 = vmatprep.subr.mxu0 0.0
    %551 = vmatpush1.msra.mxu0 0.0
    %552 = vmatprep.subr.mxu0 0.0
    %553 = vmatpush1.msra.mxu0 0.0
    %554 = vmatprep.subr.mxu0 0.0
    %555 = vmatpush1.msra.mxu0 0.0
    %556 = vmatprep.subr.mxu0 0.0
    %557 = vmatpush1.msra.mxu0 0.0
    %558 = vmatprep.subr.mxu0 0.0
    %559 = vmatpush1.msra.mxu0 0.0
    %560 = vmatprep.subr.mxu0 0.0
    %561 = vmatpush1.msra.mxu0 0.0
    %562 = vmatprep.subr.mxu0 0.0
    %563 = vmatpush1.msra.mxu0 0.0
    %564 = vmatprep.subr.mxu0 0.0
    %565 = vmatpush1.msra.mxu0 0.0
    %566 = vmatprep.subr.mxu0 0.0
    %567 = vmatpush1.msra.mxu0 0.0
    %568 = vmatprep.subr.mxu0 0.0
    %569 = vmatpush1.msra.mxu0 0.0
    %570 = vmatprep.subr.mxu0 0.0
    %571 = vmatpush1.msra.mxu0 0.0
    %572 = vmatprep.subr.mxu0 0.0
    %573 = vmatpush1.msra.mxu0 0.0
    %574 = vmatprep.subr.mxu0 0.0
    %575 = vmatpush1.msra.mxu0 0.0
    %576 = vmatprep.subr.mxu0 0.0
    %577 = vmatpush1.msra.mxu0 0.0
    %578 = vmatprep.subr.mxu0 0.0
    %579 = vmatpush1.msra.mxu0 0.0
    %580 = vmatprep.subr.mxu0 0.0
    %581 = vmatpush1.msra.mxu0 0.0
    %582 = vmatprep.subr.mxu0 0.0
    %583 = vmatpush1.msra.mxu0 0.0
    %584 = vmatprep.subr.mxu0 0.0
    %585 = vmatpush1.msra.mxu0 0.0
    %586 = vmatprep.subr.mxu0 0.0
    %587 = vmatpush1.msra.mxu0 0.0
    %588 = vmatprep.subr.mxu0 0.0
    %589 = vmatpush1.msra.mxu0 0.0
    %590 = vmatprep.subr.mxu0 0.0
    %591 = vmatpush1.msra.mxu0 0.0
    %592 = vmatprep.subr.mxu0 0.0
    %593 = vmatpush1.msra.mxu0 0.0
    %594 = vmatprep.mubr.f32.mxu0 0.0
    %595 = vmatmul.mubr.f32.gmra.mrb[0].mxu0 %v528
    %v596 = vpop.f32.mrb[0].mxu0
    %v597 = vadd.f32 0.0, %v596
    %v598 = vpop.f32.mrb[0].mxu0
    %599 = vdwg.mxu0
    %v600 = vadd.f32 %v526, %v597
    %v601 = vtanh.pop %v600
    %s602 = scalar_lea.vmem [#allocation8], 12
    %603 = vst.msk [vmem:[%s602] sm:$0x3] %vm128, %v601
    %s604 = scalar_lea.vmem [#allocation3], 14
    %v605 = vld [vmem:[%s604] sm:$0x3]
    %v607 = vsel %vm52, %v601, 0
    %609 = vmatprep.subr.mxu0 0.0
    %610 = vmatpush1.msra.mxu0 %v46
    %611 = vmatprep.subr.mxu0 0.0
    %612 = vmatpush1.msra.mxu0 %v47
    %613 = vmatprep.subr.mxu0 0.0
    %614 = vmatpush1.msra.mxu0 %v48
    %615 = vmatprep.subr.mxu0 0.0
    %616 = vmatpush1.msra.mxu0 %v49
    %617 = vmatprep.subr.mxu0 0.0
    %618 = vmatpush1.msra.mxu0 0.0
    %619 = vmatprep.subr.mxu0 0.0
    %620 = vmatpush1.msra.mxu0 0.0
    %621 = vmatprep.subr.mxu0 0.0
    %622 = vmatpush1.msra.mxu0 0.0
    %623 = vmatprep.subr.mxu0 0.0
    %624 = vmatpush1.msra.mxu0 0.0
    %625 = vmatprep.subr.mxu0 0.0
    %626 = vmatpush1.msra.mxu0 0.0
    %627 = vmatprep.subr.mxu0 0.0
    %628 = vmatpush1.msra.mxu0 0.0
    %629 = vmatprep.subr.mxu0 0.0
    %630 = vmatpush1.msra.mxu0 0.0
    %631 = vmatprep.subr.mxu0 0.0
    %632 = vmatpush1.msra.mxu0 0.0
    %633 = vmatprep.subr.mxu0 0.0
    %634 = vmatpush1.msra.mxu0 0.0
    %635 = vmatprep.subr.mxu0 0.0
    %636 = vmatpush1.msra.mxu0 0.0
    %637 = vmatprep.subr.mxu0 0.0
    %638 = vmatpush1.msra.mxu0 0.0
    %639 = vmatprep.subr.mxu0 0.0
    %640 = vmatpush1.msra.mxu0 0.0
    %641 = vmatprep.subr.mxu0 0.0
    %642 = vmatpush1.msra.mxu0 0.0
    %643 = vmatprep.subr.mxu0 0.0
    %644 = vmatpush1.msra.mxu0 0.0
    %645 = vmatprep.subr.mxu0 0.0
    %646 = vmatpush1.msra.mxu0 0.0
    %647 = vmatprep.subr.mxu0 0.0
    %648 = vmatpush1.msra.mxu0 0.0
    %649 = vmatprep.subr.mxu0 0.0
    %650 = vmatpush1.msra.mxu0 0.0
    %651 = vmatprep.subr.mxu0 0.0
    %652 = vmatpush1.msra.mxu0 0.0
    %653 = vmatprep.subr.mxu0 0.0
    %654 = vmatpush1.msra.mxu0 0.0
    %655 = vmatprep.subr.mxu0 0.0
    %656 = vmatpush1.msra.mxu0 0.0
    %657 = vmatprep.subr.mxu0 0.0
    %658 = vmatpush1.msra.mxu0 0.0
    %659 = vmatprep.subr.mxu0 0.0
    %660 = vmatpush1.msra.mxu0 0.0
    %661 = vmatprep.subr.mxu0 0.0
    %662 = vmatpush1.msra.mxu0 0.0
    %663 = vmatprep.subr.mxu0 0.0
    %664 = vmatpush1.msra.mxu0 0.0
    %665 = vmatprep.subr.mxu0 0.0
    %666 = vmatpush1.msra.mxu0 0.0
    %667 = vmatprep.subr.mxu0 0.0
    %668 = vmatpush1.msra.mxu0 0.0
    %669 = vmatprep.subr.mxu0 0.0
    %670 = vmatpush1.msra.mxu0 0.0
    %671 = vmatprep.subr.mxu0 0.0
    %672 = vmatpush1.msra.mxu0 0.0
    %673 = vmatprep.mubr.f32.mxu0 0.0
    %674 = vmatmul.mubr.f32.gmra.mrb[0].mxu0 %v607
    %v675 = vpop.f32.mrb[0].mxu0
    %v676 = vadd.f32 0.0, %v675
    %v677 = vpop.f32.mrb[0].mxu0
    %678 = vdwg.mxu0
    %v679 = vadd.f32 %v605, %v676
    %v680 = vtanh.pop %v679
    %s681 = scalar_lea.vmem [#allocation8], 14
    %682 = vst.msk [vmem:[%s681] sm:$0x3] %vm128, %v680
    %683 = vst.msk [vmem:[#allocation2] sm:$0x3] %vm128, %v680
    // Predicated region
    $region22: #{tpu_custom_call.1} parent=1 // pred_check
      _
    $region23: #{tpu_custom_call.1} parent=1 // pred_check_branch
      %685 = sbr.rel (0) target = $region25
    $region24: #{tpu_custom_call.1} parent=1 // pred_region
      %s687 = ssub.s32 256, 256
      %688 = vsyncadd [#allocation5], %s687
      %s689 = sshll.u32 [#allocation8], 4
      %s690 = int_to_ptr.vmem [resolvable:$true] %s689
      %695 = dma.vmem_to_hbm [thread:$0]  %s690, 256, %s2, [#allocation5], 32, 32, 2
    $region25: #{tpu_custom_call.1} parent=1 // pred_fallthru
      _
    // Predicated region
    $region26: #{tpu_custom_call.1} parent=1 // pred_check
      _
    $region27: #{tpu_custom_call.1} parent=1 // pred_check_branch
      %697 = sbr.rel (0) target = $region29
    $region28: #{tpu_custom_call.1} parent=1 // pred_region
      %698 = dma.done [#allocation5], 256
    $region29: #{tpu_custom_call.1} parent=1 // pred_fallthru
      _
    %699 = vsyncpa [#allocation4], 1
    %700 = vsyncpa [#allocation7], 1
    %701 = vsyncpa [#allocation5], 1

</llo_original>
